<compile_context>
chip_gen: v7x
topology: tpu7x:2x2x1
jax: 0.10.0
libtpu: 0.0.40
codegen_flags: <defaults>
</compile_context>

<pallas_src>
import functools

import jax
import jax.numpy as jnp
from jax.experimental import pallas as pl
from jax.experimental.pallas import tpu as pltpu


def _verhor_kernel(x_ref, wk_ref, b_ref, o_ref):
    # x_ref:  (TB, K)  flattened inputs (compute dtype, e.g. bf16)
    # wk_ref: (K, N)   pre-transposed Kronecker weight (compute dtype)
    # b_ref:  (1, N)   flattened bias (f32)
    # o_ref:  (TB, N)  flattened outputs (lane-dense)
    y = jnp.dot(x_ref[...], wk_ref[...], preferred_element_type=jnp.float32)
    o_ref[...] = (y + b_ref[...]).astype(o_ref.dtype)


def _round_up(n, m):
    return ((n + m - 1) // m) * m


def _tpu_tiling_defaults():
    """Return (tb_max, num_tensorcores) per TPU generation; conservative fallback."""
    try:
        kind = jax.devices()[0].device_kind.lower()
    except Exception:
        kind = ""
    if "v7" in kind:
        return 4096, 2          # 2 TCs/chip -> want >=2 balanced grid steps
    if "v5 lite" in kind or "v5e" in kind or "v5lite" in kind:
        return 2048, 1          # smaller scoped-VMEM default on v5e
    return 4096, 1              # v6e / unknown


def verhor_mat(x, w_ver, w_hor, b, *, compute_dtype=jnp.bfloat16,
               tb_max=None, force_pallas=False, min_pallas_rows=64):
    """x: (..., hor_in, ver_in) -> (..., hor_out, ver_out)."""
    *lead, hor_in, ver_in = x.shape
    ver_out, ver_in_w = w_ver.shape
    hor_out, hor_in_w = w_hor.shape
    assert ver_in_w == ver_in and hor_in_w == hor_in
    assert b.shape == (hor_out, ver_out)

    B = 1
    for d in lead:
        B *= d
    K = hor_in * ver_in          # contraction dim (128 for the default config)
    N = hor_out * ver_out        # lane-dense output width (288 default)

    # Degenerate empty batch: no grid to run.
    if B == 0:
        return jnp.zeros((*lead, hor_out, ver_out), dtype=x.dtype)

    # Tiny-batch fast path: fixed pallas_call / pipeline setup cost dominates,
    # plain XLA fusion is strictly faster there.
    if B < min_pallas_rows and not force_pallas:
        t = jnp.einsum("...hv,ov->...ho", x, w_ver)
        y = jnp.einsum("oh,...hv->...ov", w_hor, t)
        return (y + b).astype(x.dtype)

    # Fold the two linears into one Kronecker weight:
    #   y[o, p] = sum_{h, v} W_hor[o, h] * W_ver[p, v] * x[h, v] + b[o, p]
    #   => y_flat = x_flat @ kron(W_hor, W_ver)^T + b_flat
    # kron is computed in f32 and only then cast to the compute dtype (keeps the
    # fused weight's precision). Under jit with static weights XLA constant-folds
    # and caches this (K, N) relayout.
    x_flat = x.reshape(B, K).astype(compute_dtype)
    wk_t = jnp.kron(w_hor.astype(jnp.float32),
                    w_ver.astype(jnp.float32)).T.astype(compute_dtype)   # (K, N)
    b_flat = b.reshape(1, N).astype(jnp.float32)

    # Batch tiling: big tiles amortize the ~0.35us/step overhead; on v7x make sure
    # the grid has >=2 balanced steps so both TensorCores are used.
    auto_tb_max, num_tc = _tpu_tiling_defaults()
    if tb_max is None:
        tb_max = auto_tb_max
    if B <= 8 * num_tc:
        tb = B                                      # single step; tb == full dim
    else:
        target_steps = max(num_tc, pl.cdiv(B, tb_max))
        tb = min(tb_max, _round_up(pl.cdiv(B, target_steps), 8))
    grid = (pl.cdiv(B, tb),)
    # Partial last tile (B % tb != 0): garbage rows get matmul'd but their stores
    # are clipped by Pallas; safe here because there is no cross-row reduction.

    in_bytes = jnp.dtype(compute_dtype).itemsize
    out_bytes = jnp.dtype(x.dtype).itemsize
    # Double-buffered x/out tiles + (small) weight/bias buffers + headroom.
    vmem_bytes = 2 * tb * (K * in_bytes + N * out_bytes) + 2 * (K * N * in_bytes + N * 4)
    vmem_limit = int(min(max(vmem_bytes + (4 << 20), 16 << 20), 48 << 20))

    cost = pl.CostEstimate(
        flops=2 * B * K * N,
        transcendentals=0,
        bytes_accessed=B * K * in_bytes + K * N * in_bytes + B * N * out_bytes,
    )

    out_flat = pl.pallas_call(
        _verhor_kernel,
        out_shape=jax.ShapeDtypeStruct((B, N), x.dtype),
        grid_spec=pltpu.PrefetchScalarGridSpec(
            num_scalar_prefetch=0,
            grid=grid,
            in_specs=[
                pl.BlockSpec((tb, K), lambda i: (i, 0)),
                pl.BlockSpec((K, N), lambda i: (0, 0)),
                pl.BlockSpec((1, N), lambda i: (0, 0)),
            ],
            out_specs=pl.BlockSpec((tb, N), lambda i: (i, 0)),
        ),
        compiler_params=pltpu.CompilerParams(
            dimension_semantics=("parallel",),
            vmem_limit_bytes=vmem_limit,
        ),
        cost_estimate=cost,
    )(x_flat, wk_t, b_flat)

    return out_flat.reshape(*lead, hor_out, ver_out)


def _reference(x, w_ver, w_hor, b):
    t = jnp.einsum("...hv,ov->...ho", x, w_ver)        # ver Linear
    y = jnp.einsum("oh,...hv->...ov", w_hor, t)        # hor Linear on transposed
    return y + b


if __name__ == "__main__":
    # Module hyper-params (small, consistent with VerHorMat __init__)
    ver_in, ver_out = 16, 24
    hor_in, hor_out = 8, 12
    batch = 2

    key = jax.random.PRNGKey(0)
    kx, kv, kh, kb, kx2 = jax.random.split(key, 5)

    x = jax.random.normal(kx, (batch, hor_in, ver_in), dtype=jnp.float32)

    # Deterministic synthetic parameter init.
    # nn.Linear weights (no bias): shapes (out, in).
    w_ver = jax.random.normal(kv, (ver_out, ver_in), dtype=jnp.float32) * (1.0 / jnp.sqrt(ver_in))
    w_hor = jax.random.normal(kh, (hor_out, hor_in), dtype=jnp.float32) * (1.0 / jnp.sqrt(hor_in))
    # b: xavier_normal_ with gain for relu (sqrt(2)); fan_in=ver_out, fan_out=hor_out.
    xavier_std = jnp.sqrt(2.0) * jnp.sqrt(2.0 / (hor_out + ver_out))
    b = jax.random.normal(kb, (hor_out, ver_out), dtype=jnp.float32) * xavier_std

    # Force the Pallas path even at tiny batch so the kernel is exercised.
    run_bf16 = jax.jit(functools.partial(verhor_mat, force_pallas=True))
    run_f32 = jax.jit(functools.partial(verhor_mat, force_pallas=True,
                                        compute_dtype=jnp.float32))

    ref = _reference(x, w_ver, w_hor, b)

    out = jax.block_until_ready(run_bf16(x, w_ver, w_hor, b))
    assert out.shape == (batch, hor_out, ver_out)
    assert jnp.allclose(out, ref, atol=5e-2, rtol=5e-2), "bf16 kernel mismatch vs reference"

    out32 = jax.block_until_ready(run_f32(x, w_ver, w_hor, b))
    assert jnp.allclose(out32, ref, atol=1e-4, rtol=1e-4), "f32 kernel mismatch vs reference"

    # Slightly larger batch to exercise the tiled / multi-step grid path.
    x_big = jax.random.normal(kx2, (640, hor_in, ver_in), dtype=jnp.float32)
    out_big = jax.block_until_ready(run_bf16(x_big, w_ver, w_hor, b))
    ref_big = _reference(x_big, w_ver, w_hor, b)
    assert jnp.allclose(out_big, ref_big, atol=5e-2, rtol=5e-2), "batched kernel mismatch"

    print("KERNEL_OK")
</pallas_src>

<mosaic_0001>
module attributes {stable_mosaic.version = 11 : i64} {
  func.func @_verhor_kernel(%arg0: i32, %arg1: memref<2x128xbf16, #tpu.memory_space<vmem>>, %arg2: memref<128x288xbf16, #tpu.memory_space<vmem>>, %arg3: memref<1x288xf32, #tpu.memory_space<vmem>>, %arg4: memref<2x288xf32, #tpu.memory_space<vmem>>) attributes {dimension_semantics = [#tpu.dimension_semantics<parallel>], iteration_bounds = array<i64: 1>, scalar_prefetch = 0 : i64, scratch_operands = 0 : i64, tpu.core_type = #tpu.core_type<tc>, window_params = [{transform_indices = @transform_0, window_bounds = array<i64: 2, 128>}, {pipeline_mode = #tpu.pipeline_mode<synchronous>, transform_indices = @transform_1, window_bounds = array<i64: 128, 288>}, {pipeline_mode = #tpu.pipeline_mode<synchronous>, transform_indices = @transform_2, window_bounds = array<i64: 1, 288>}, {transform_indices = @transform_3, window_bounds = array<i64: 2, 288>}]} {
    %c0 = arith.constant 0 : index
    %c0_0 = arith.constant 0 : index
    %0 = vector.load %arg1[%c0, %c0_0] : memref<2x128xbf16, #tpu.memory_space<vmem>>, vector<2x128xbf16>
    %c0_1 = arith.constant 0 : index
    %c0_2 = arith.constant 0 : index
    %1 = vector.load %arg2[%c0_1, %c0_2] : memref<128x288xbf16, #tpu.memory_space<vmem>>, vector<128x288xbf16>
    %cst = arith.constant dense<0.000000e+00> : vector<2x288xf32>
    %2 = tpu.matmul %0, %1, %cst {dimension_numbers = #tpu.dot_dimension_numbers<[1], [0], [0], [1], [0, 0, 1, 1], [], []>} : vector<2x128xbf16>, vector<128x288xbf16>, vector<2x288xf32> -> vector<2x288xf32>
    %c0_3 = arith.constant 0 : index
    %c0_4 = arith.constant 0 : index
    %3 = vector.load %arg3[%c0_3, %c0_4] : memref<1x288xf32, #tpu.memory_space<vmem>>, vector<1x288xf32>
    %4 = vector.broadcast %3 : vector<1x288xf32> to vector<2x288xf32>
    %5 = arith.addf %2, %4 : vector<2x288xf32>
    %c0_5 = arith.constant 0 : index
    %c0_6 = arith.constant 0 : index
    %6 = vector.load %arg4[%c0_5, %c0_6] : memref<2x288xf32, #tpu.memory_space<vmem>>, vector<2x288xf32>
    tpu.vector_store %arg4[%c0_5, %c0_6], %5 {strides = array<i32>} : memref<2x288xf32, #tpu.memory_space<vmem>>, vector<2x288xf32>,
    return
  }
  func.func @transform_0(%arg0: i32) -> (i32, i32) {
    %c0_i32 = arith.constant 0 : i32
    %c0_i32_0 = arith.constant 0 : i32
    return %arg0, %c0_i32 : i32, i32
  }
  func.func @transform_1(%arg0: i32) -> (i32, i32) {
    %c0_i32 = arith.constant 0 : i32
    %c0_i32_0 = arith.constant 0 : i32
    %c0_i32_1 = arith.constant 0 : i32
    return %c0_i32, %c0_i32_0 : i32, i32
  }
  func.func @transform_2(%arg0: i32) -> (i32, i32) {
    %c0_i32 = arith.constant 0 : i32
    %c0_i32_0 = arith.constant 0 : i32
    %c0_i32_1 = arith.constant 0 : i32
    return %c0_i32, %c0_i32_0 : i32, i32
  }
  func.func @transform_3(%arg0: i32) -> (i32, i32) {
    %c0_i32 = arith.constant 0 : i32
    %c0_i32_0 = arith.constant 0 : i32
    return %arg0, %c0_i32 : i32, i32
  }
}

</mosaic_0001>

<llo_original>
// kernel: verhor_mat.1
$region0: #{verhor_mat.1}
  #allocation0 [shape = 'u32[]', space=smem, size = 0x4, offset = 0x4, fixed_abs, tag = 'smem constant byte address 0x4 - core index']
  #allocation1 [shape = 'u32[144,128]{1,0:T(1,128)}', space=vmem, size = 0x12000, scoped, tag = 'internal scratch']
  %s0 = inlined_call_operand.vmem [shape: bf16[2,128], index: 0, kind: input, shape index: {}]
  %s1 = inlined_call_operand.vmem [shape: bf16[128,288], index: 1, kind: input, shape index: {}]
  %s2 = inlined_call_operand.vmem [shape: f32[1,288], index: 2, kind: input, shape index: {}]
  %s3 = inlined_call_operand.vmem [shape: f32[2,288], index: 3, kind: output, shape index: {}]
  %s4 = sld [smem:[#allocation0]]
  $region22: #{verhor_mat.1} parent=0
    _
  %s6 = ssub.s32 1, %s4
  %s7 = scalar_select 0, %s6, %s4
  // Predicated region
  $region2: #{verhor_mat.1} parent=0 // pred_check
    _
  $region3: #{verhor_mat.1} parent=0 // pred_check_branch
    %9 = sbr.rel (0) target = $region5
  $region4: #{verhor_mat.1} parent=0 // pred_region
    _
  $region5: #{verhor_mat.1} parent=0 // pred_fallthru
    _
  // Predicated region
  $region6: #{verhor_mat.1} parent=0 // pred_check
    _
  $region7: #{verhor_mat.1} parent=0 // pred_check_branch
    %11 = sbr.rel (0) target = $region9
  $region8: #{verhor_mat.1} parent=0 // pred_region
    _
  $region9: #{verhor_mat.1} parent=0 // pred_fallthru
    _
  // Predicated region
  $region10: #{verhor_mat.1} parent=0 // pred_check
    _
  $region11: #{verhor_mat.1} parent=0 // pred_check_branch
    %13 = sbr.rel (0) target = $region13
  $region12: #{verhor_mat.1} parent=0 // pred_region
    _
  $region13: #{verhor_mat.1} parent=0 // pred_fallthru
    _
  %v15 = vld [vmem:[%s0] sm:$0x1]
  %v16 = vld [vmem:[%s1] sm:$0xff]
  %v17 = vld [vmem:[%s1 + $0x8] sm:$0xf]
  %v18 = vld [vmem:[%s1 + $0xc] sm:$0xff]
  %v19 = vld [vmem:[%s1 + $0x14] sm:$0xf]
  %v20 = vld [vmem:[%s1 + $0x18] sm:$0xff]
  %v21 = vld [vmem:[%s1 + $0x20] sm:$0xf]
  %v22 = vld [vmem:[%s1 + $0x24] sm:$0xff]
  %v23 = vld [vmem:[%s1 + $0x2c] sm:$0xf]
  %v24 = vld [vmem:[%s1 + $0x30] sm:$0xff]
  %v25 = vld [vmem:[%s1 + $0x38] sm:$0xf]
  %v26 = vld [vmem:[%s1 + $0x3c] sm:$0xff]
  %v27 = vld [vmem:[%s1 + $0x44] sm:$0xf]
  %v28 = vld [vmem:[%s1 + $0x48] sm:$0xff]
  %v29 = vld [vmem:[%s1 + $0x50] sm:$0xf]
  %v30 = vld [vmem:[%s1 + $0x54] sm:$0xff]
  %v31 = vld [vmem:[%s1 + $0x5c] sm:$0xf]
  %v32 = vld [vmem:[%s1 + $0x60] sm:$0xff]
  %v33 = vld [vmem:[%s1 + $0x68] sm:$0xf]
  %v34 = vld [vmem:[%s1 + $0x6c] sm:$0xff]
  %v35 = vld [vmem:[%s1 + $0x74] sm:$0xf]
  %v36 = vld [vmem:[%s1 + $0x78] sm:$0xff]
  %v37 = vld [vmem:[%s1 + $0x80] sm:$0xf]
  %v38 = vld [vmem:[%s1 + $0x84] sm:$0xff]
  %v39 = vld [vmem:[%s1 + $0x8c] sm:$0xf]
  %v40 = vld [vmem:[%s1 + $0x90] sm:$0xff]
  %v41 = vld [vmem:[%s1 + $0x98] sm:$0xf]
  %v42 = vld [vmem:[%s1 + $0x9c] sm:$0xff]
  %v43 = vld [vmem:[%s1 + $0xa4] sm:$0xf]
  %v44 = vld [vmem:[%s1 + $0xa8] sm:$0xff]
  %v45 = vld [vmem:[%s1 + $0xb0] sm:$0xf]
  %v46 = vld [vmem:[%s1 + $0xb4] sm:$0xff]
  %v47 = vld [vmem:[%s1 + $0xbc] sm:$0xf]
  %v48 = vld [vmem:[%s2] sm:$0x7]
  %v50 = vlaneseq
  %v51 = vshrl.u32 %v50, 7
  %v52 = vsub.s32 0, %v51
  %v53 = vrot.slane %v48, %v52
  %v54 = vlaneseq
  %v55 = vshrl.u32 %v54, 7
  %v56 = vsub.s32 1, %v55
  %v57 = vrot.slane %v48, %v56
  %v58 = vlaneseq
  %v59 = vshrl.u32 %v58, 7
  %v60 = vsub.s32 2, %v59
  %v61 = vrot.slane %v48, %v60
  %v97 = vunpack.c.l.b16 %v16
  %v98 = vunpack.c.h.b16 %v16
  %v99 = vunpack.c.l.b16 %v17
  %v100 = vunpack.c.l.b16 %v18
  %v101 = vunpack.c.h.b16 %v18
  %v102 = vunpack.c.l.b16 %v19
  %v103 = vunpack.c.l.b16 %v20
  %v104 = vunpack.c.h.b16 %v20
  %v105 = vunpack.c.l.b16 %v21
  %v106 = vunpack.c.l.b16 %v22
  %v107 = vunpack.c.h.b16 %v22
  %v108 = vunpack.c.l.b16 %v23
  %v109 = vunpack.c.l.b16 %v24
  %v110 = vunpack.c.h.b16 %v24
  %v111 = vunpack.c.l.b16 %v25
  %v112 = vunpack.c.l.b16 %v26
  %v113 = vunpack.c.h.b16 %v26
  %v114 = vunpack.c.l.b16 %v27
  %v115 = vunpack.c.l.b16 %v28
  %v116 = vunpack.c.h.b16 %v28
  %v117 = vunpack.c.l.b16 %v29
  %v118 = vunpack.c.l.b16 %v30
  %v119 = vunpack.c.h.b16 %v30
  %v120 = vunpack.c.l.b16 %v31
  %v121 = vunpack.c.l.b16 %v32
  %v122 = vunpack.c.h.b16 %v32
  %v123 = vunpack.c.l.b16 %v33
  %v124 = vunpack.c.l.b16 %v34
  %v125 = vunpack.c.h.b16 %v34
  %v126 = vunpack.c.l.b16 %v35
  %v127 = vunpack.c.l.b16 %v36
  %v128 = vunpack.c.h.b16 %v36
  %v129 = vunpack.c.l.b16 %v37
  %v130 = vunpack.c.l.b16 %v38
  %v131 = vunpack.c.h.b16 %v38
  %v132 = vunpack.c.l.b16 %v39
  %v133 = vunpack.c.l.b16 %v40
  %v134 = vunpack.c.h.b16 %v40
  %v135 = vunpack.c.l.b16 %v41
  %v136 = vunpack.c.l.b16 %v42
  %v137 = vunpack.c.h.b16 %v42
  %v138 = vunpack.c.l.b16 %v43
  %v139 = vunpack.c.l.b16 %v44
  %v140 = vunpack.c.h.b16 %v44
  %v141 = vunpack.c.l.b16 %v45
  %v142 = vunpack.c.l.b16 %v46
  %v143 = vunpack.c.h.b16 %v46
  %v144 = vunpack.c.l.b16 %v47
  %v145 = vpack.c.b16 %v100, %v97
  %v146 = vpack.c.b16 %v101, %v98
  %v147 = vpack.c.b16 %v102, %v99
  %v148 = vpack.c.b16 %v106, %v103
  %v149 = vpack.c.b16 %v107, %v104
  %v150 = vpack.c.b16 %v108, %v105
  %v151 = vpack.c.b16 %v112, %v109
  %v152 = vpack.c.b16 %v113, %v110
  %v153 = vpack.c.b16 %v114, %v111
  %v154 = vpack.c.b16 %v118, %v115
  %v155 = vpack.c.b16 %v119, %v116
  %v156 = vpack.c.b16 %v120, %v117
  %v157 = vpack.c.b16 %v124, %v121
  %v158 = vpack.c.b16 %v125, %v122
  %v159 = vpack.c.b16 %v126, %v123
  %v160 = vpack.c.b16 %v130, %v127
  %v161 = vpack.c.b16 %v131, %v128
  %v162 = vpack.c.b16 %v132, %v129
  %v163 = vpack.c.b16 %v136, %v133
  %v164 = vpack.c.b16 %v137, %v134
  %v165 = vpack.c.b16 %v138, %v135
  %v166 = vpack.c.b16 %v142, %v139
  %v167 = vpack.c.b16 %v143, %v140
  %v168 = vpack.c.b16 %v144, %v141
  %193 = vmatprep.subr.bf16.mxu0 %v146
  %194 = vmatpush1.bf16.msra.mxu0 %v145
  %195 = vmatprep.subr.bf16.mxu0 %v149
  %196 = vmatpush1.bf16.msra.mxu0 %v148
  %197 = vmatprep.subr.bf16.mxu0 %v152
  %198 = vmatpush1.bf16.msra.mxu0 %v151
  %199 = vmatprep.subr.bf16.mxu0 %v155
  %200 = vmatpush1.bf16.msra.mxu0 %v154
  %201 = vmatprep.subr.bf16.mxu0 %v158
  %202 = vmatpush1.bf16.msra.mxu0 %v157
  %203 = vmatprep.subr.bf16.mxu0 %v161
  %204 = vmatpush1.bf16.msra.mxu0 %v160
  %205 = vmatprep.subr.bf16.mxu0 %v164
  %206 = vmatpush1.bf16.msra.mxu0 %v163
  %207 = vmatprep.subr.bf16.mxu0 %v167
  %208 = vmatpush1.bf16.msra.mxu0 %v166
  %209 = vmatprep.subr.bf16.mxu0 0
  %210 = vmatpush1.bf16.msra.mxu0 0
  %211 = vmatprep.subr.bf16.mxu0 0
  %212 = vmatpush1.bf16.msra.mxu0 0
  %213 = vmatprep.subr.bf16.mxu0 0
  %214 = vmatpush1.bf16.msra.mxu0 0
  %215 = vmatprep.subr.bf16.mxu0 0
  %216 = vmatpush1.bf16.msra.mxu0 0
  %217 = vmatprep.subr.bf16.mxu0 0
  %218 = vmatpush1.bf16.msra.mxu0 0
  %219 = vmatprep.subr.bf16.mxu0 0
  %220 = vmatpush1.bf16.msra.mxu0 0
  %221 = vmatprep.subr.bf16.mxu0 0
  %222 = vmatpush1.bf16.msra.mxu0 0
  %223 = vmatprep.subr.bf16.mxu0 0
  %224 = vmatpush1.bf16.msra.mxu0 0
  %225 = vmatprep.mubr.bf16.mxu0 0
  %226 = vmatmul.mubr.bf16.gmra.mrb[0].mxu0 %v15
  %v227 = vpop.f32.mrb[0].mxu0
  %v228 = vadd.f32 %v53, %v227
  %v229 = vpop.f32.mrb[0].mxu0
  %v230 = vadd.f32 %v57, %v229
  %v231 = vpop.f32.mrb[0].mxu0
  %v232 = vpop.f32.mrb[0].mxu0
  %233 = vdwg.mxu0
  %234 = vmatprep.subr.bf16.mxu0 0
  %235 = vmatpush1.bf16.msra.mxu0 %v147
  %236 = vmatprep.subr.bf16.mxu0 0
  %237 = vmatpush1.bf16.msra.mxu0 %v150
  %238 = vmatprep.subr.bf16.mxu0 0
  %239 = vmatpush1.bf16.msra.mxu0 %v153
  %240 = vmatprep.subr.bf16.mxu0 0
  %241 = vmatpush1.bf16.msra.mxu0 %v156
  %242 = vmatprep.subr.bf16.mxu0 0
  %243 = vmatpush1.bf16.msra.mxu0 %v159
  %244 = vmatprep.subr.bf16.mxu0 0
  %245 = vmatpush1.bf16.msra.mxu0 %v162
  %246 = vmatprep.subr.bf16.mxu0 0
  %247 = vmatpush1.bf16.msra.mxu0 %v165
  %248 = vmatprep.subr.bf16.mxu0 0
  %249 = vmatpush1.bf16.msra.mxu0 %v168
  %250 = vmatprep.subr.bf16.mxu0 0
  %251 = vmatpush1.bf16.msra.mxu0 0
  %252 = vmatprep.subr.bf16.mxu0 0
  %253 = vmatpush1.bf16.msra.mxu0 0
  %254 = vmatprep.subr.bf16.mxu0 0
  %255 = vmatpush1.bf16.msra.mxu0 0
  %256 = vmatprep.subr.bf16.mxu0 0
  %257 = vmatpush1.bf16.msra.mxu0 0
  %258 = vmatprep.subr.bf16.mxu0 0
  %259 = vmatpush1.bf16.msra.mxu0 0
  %260 = vmatprep.subr.bf16.mxu0 0
  %261 = vmatpush1.bf16.msra.mxu0 0
  %262 = vmatprep.subr.bf16.mxu0 0
  %263 = vmatpush1.bf16.msra.mxu0 0
  %264 = vmatprep.subr.bf16.mxu0 0
  %265 = vmatpush1.bf16.msra.mxu0 0
  %266 = vmatprep.mubr.bf16.mxu0 0
  %267 = vmatmul.mubr.bf16.gmra.mrb[0].mxu0 %v15
  %v268 = vpop.f32.mrb[0].mxu0
  %v269 = vadd.f32 %v61, %v268
  %v270 = vpop.f32.mrb[0].mxu0
  %v271 = vpop.f32.mrb[0].mxu0
  %v272 = vpop.f32.mrb[0].mxu0
  %273 = vdwg.mxu0
  %v277 = vcombine.low %v228, %v230
  %v279 = vunpack.c.l.s4 1983009808
  %v280 = vunpack.c.0.s8 %v279
  %v281 = vlaneseq
  %v282 = vshrl.u32 %v281, 7
  %v283 = vsub.s32 %v280, %v282
  %v284 = vrot.slane %v277, %v283
  %v286 = vunpack.c.l.s4 1983009808
  %v287 = vunpack.c.0.s8 %v286
  %v288 = vlaneseq
  %v289 = vshrl.u32 %v288, 7
  %v290 = vsub.s32 %v287, %v289
  %v291 = vrot.slane %v269, %v290
  %v292 = vcombine.low %v284, %v291
  %vm294 = vcmask 1041408
  %vm295 = vcmask 1043458
  %vm296 = vmor %vm295, %vm294
  %vm297 = vcmask 259076
  %vm298 = vmor %vm297, %vm296
  %299 = vst.msk [vmem:[%s3] sm:$0x3f] %vm298, %v292
  // Predicated region
  $region14: #{verhor_mat.1} parent=0 // pred_check
    _
  $region15: #{verhor_mat.1} parent=0 // pred_check_branch
    %301 = sbr.rel (0) target = $region17
  $region16: #{verhor_mat.1} parent=0 // pred_region
    _
  $region17: #{verhor_mat.1} parent=0 // pred_fallthru
    _
  // Predicated region
  $region18: #{verhor_mat.1} parent=0 // pred_check
    _
  $region19: #{verhor_mat.1} parent=0 // pred_check_branch
    %303 = sbr.rel (0) target = $region21
  $region20: #{verhor_mat.1} parent=0 // pred_region
    _
  $region21: #{verhor_mat.1} parent=0 // pred_fallthru
    _

</llo_original>
